<compile_context>
chip_gen: v7x
topology: tpu7x:2x2x1
jax: 0.10.0
libtpu: 0.0.40
codegen_flags: <defaults>
</compile_context>

<pallas_src>
import functools

import jax
import jax.numpy as jnp
from jax.experimental import pallas as pl
from jax.experimental.pallas import tpu as pltpu


def _round_up(x: int, m: int) -> int:
    return ((x + m - 1) // m) * m


def _cdiv(a: int, b: int) -> int:
    return (a + b - 1) // b


def _vmem_capacity_bytes() -> int:
    """Physical VMEM on this chip; conservative fallback (v7x = 64 MiB)."""
    try:
        return int(pltpu.get_tpu_info().vmem_capacity_bytes)
    except Exception:
        return 64 << 20


def _working_set_bytes(tm: int, tn: int, k: int, in_b: int, out_b: int) -> int:
    # Double-buffered x block + W block + output block.
    return 2 * (tm * k * in_b + k * tn * in_b + tm * tn * out_b)


def prepare_unembed_weight(w_u, compute_dtype=jnp.bfloat16):
    """One-time weight prep (do OUTSIDE the per-step path): cast W_U to the MXU
    compute dtype so the kernel never re-materializes a W_U-sized copy per call."""
    # TODO(synk): optional int8 W_U quantization path for v5e (halves the
    # dominant HBM stream again); needs a per-column scale + in-kernel dequant.
    return jnp.asarray(w_u, dtype=compute_dtype)


def _unembed_kernel(x_ref, w_ref, o_ref):
    # One MXU pass per (M-tile, N-tile): full d_model reduction in a single dot,
    # f32 accumulation on the MXU, written straight to the output tile.
    o_ref[...] = jnp.dot(
        x_ref[...], w_ref[...], preferred_element_type=jnp.float32
    ).astype(o_ref.dtype)


@functools.partial(
    jax.jit,
    static_argnames=("tm", "tn", "compute_dtype", "out_dtype", "w_buffers",
                     "vmem_limit_bytes"),
)
def unembed(x, w_u, *, tm=256, tn=2048, compute_dtype=jnp.bfloat16,
            out_dtype=jnp.float32, w_buffers=2, vmem_limit_bytes=None):
    """Computes x @ w_u with a tiled Pallas matmul (bf16 in / f32 accum / f32 out).

    x:   (..., d_model)
    w_u: (d_model, d_vocab) — ideally already prepared via
         prepare_unembed_weight() so no per-call cast of the big tensor occurs.
    out: (..., d_vocab) in `out_dtype` (f32 by default, like the f32 module).
    """
    *lead, d_model = x.shape
    d_model_w, d_vocab = w_u.shape
    assert d_model == d_model_w, (d_model, d_model_w)

    M = 1
    for s in lead:
        M *= s
    x2d = x.reshape(M, d_model).astype(compute_dtype)

    if w_u.dtype != compute_dtype:
        # Fallback only — prefer prepare_unembed_weight() outside the hot path.
        w_u = w_u.astype(compute_dtype)

    # Effective tile sizes: clamp to the problem size while keeping
    # sublane/lane alignment (second-to-last dim multiple of 8, last of 128).
    tm_eff = min(tm, _round_up(M, 8))
    tn_eff = min(tn, _round_up(d_vocab, 128))

    # Shrink tiles if the double-buffered full-K working set would not fit a
    # conservative VMEM budget on this chip (v7x has only 64 MiB physical).
    in_b = jnp.dtype(compute_dtype).itemsize
    out_b = jnp.dtype(out_dtype).itemsize
    vmem_cap = _vmem_capacity_bytes()
    tile_budget = max(24 << 20, int(vmem_cap * 0.55))
    while (_working_set_bytes(tm_eff, tn_eff, d_model, in_b, out_b) > tile_budget
           and tn_eff > 512):
        tn_eff = max(512, _round_up(tn_eff // 2, 128))
    while (_working_set_bytes(tm_eff, tn_eff, d_model, in_b, out_b) > tile_budget
           and tm_eff > 64):
        tm_eff = max(64, _round_up(tm_eff // 2, 8))
    # TODO(synk): for very large d_model (>= ~8k on v7x) reintroduce a K grid
    # axis ("arbitrary") with an f32 VMEM accumulator instead of shrinking tn.

    grid_n = _cdiv(d_vocab, tn_eff)
    grid_m = _cdiv(M, tm_eff)
    # N (vocab) is the slow/outer axis: one W_U slab stays resident in VMEM
    # across all inner M steps; only the small x blocks are re-streamed.
    grid = (grid_n, grid_m)

    if vmem_limit_bytes is None:
        ws = _working_set_bytes(tm_eff, tn_eff, d_model, in_b, out_b)
        vmem_limit_bytes = min(int(vmem_cap * 0.85),
                               max(32 << 20, ws + (8 << 20)))

    w_kwargs = {}
    if w_buffers != 2:
        # Deeper buffering on the big, infrequently-changing operand if DMA
        # gaps remain at outer-step boundaries.
        w_kwargs["pipeline_mode"] = pl.Buffered(w_buffers)

    # Advisory cost estimate for the (N outer, M inner) loop order:
    # W_U read once, x re-streamed once per vocab slab, logits written once.
    flops = 2 * M * d_model * d_vocab
    bytes_accessed = (
        w_u.size * in_b + grid_n * x2d.size * in_b + M * d_vocab * out_b
    )

    out2d = pl.pallas_call(
        _unembed_kernel,
        out_shape=jax.ShapeDtypeStruct((M, d_vocab), out_dtype),
        grid_spec=pltpu.PrefetchScalarGridSpec(
            num_scalar_prefetch=0,
            grid=grid,
            in_specs=[
                # x row-block: full d_model (no K grid axis); depends only on
                # the inner M index.
                pl.BlockSpec((tm_eff, d_model), lambda j, i: (i, 0)),
                # W_U column slab: full d_model rows, lane-dense columns;
                # depends only on the outer vocab index (stays resident in
                # VMEM across the inner M loop).
                pl.BlockSpec((d_model, tn_eff), lambda j, i: (0, j), **w_kwargs),
            ],
            out_specs=pl.BlockSpec((tm_eff, tn_eff), lambda j, i: (i, j)),
        ),
        compiler_params=pltpu.CompilerParams(
            dimension_semantics=("parallel", "parallel"),
            vmem_limit_bytes=vmem_limit_bytes,
        ),
        cost_estimate=pl.CostEstimate(
            flops=flops, transcendentals=0, bytes_accessed=bytes_accessed
        ),
    )(x2d, w_u)

    return out2d.reshape(*lead, d_vocab)


if __name__ == "__main__":
    # Small shapes consistent with the module: d_model=32, d_vocab=128,
    # x is a (batch=2, seq=8, d_model=32) activation tensor.
    d_model, d_vocab = 32, 128
    batch, seq = 2, 8

    key = jax.random.PRNGKey(0)
    k_w, k_x, k_w2, k_x2 = jax.random.split(key, 4)

    # Deterministic parameter init mirroring: randn(d_model, d_vocab) / sqrt(d_vocab)
    W_U = jax.random.normal(k_w, (d_model, d_vocab), dtype=jnp.float32) / (
        d_vocab**0.5
    )
    # NOTE: the type hint says LongTensor, but matmul semantics require float;
    # we use float32 activations (as in actual use of this module).
    x = jax.random.normal(k_x, (batch, seq, d_model), dtype=jnp.float32)

    W_U_prep = prepare_unembed_weight(W_U)  # one-time bf16 cast, outside hot path
    out = unembed(x, W_U_prep)
    out = jax.block_until_ready(out)
    assert out.shape == (batch, seq, d_vocab)
    assert out.dtype == jnp.float32

    # Tight check: same bf16-quantized inputs, f32 math (matches MXU bf16 x bf16
    # with f32 accumulation up to summation order).
    ref_bf16 = jnp.matmul(
        x.astype(jnp.bfloat16).astype(jnp.float32),
        W_U.astype(jnp.bfloat16).astype(jnp.float32),
    )
    assert jnp.allclose(out, ref_bf16, atol=1e-3, rtol=1e-3)

    # Sanity check vs. pure-f32 reference (looser tolerance due to bf16 inputs).
    ref_f32 = jnp.matmul(x, W_U)
    assert jnp.allclose(out, ref_f32, atol=1e-1, rtol=1e-1)

    # Ragged-shape check: exercises the masked edge-block path (M=15 not a
    # multiple of tm, d_vocab=200 not a multiple of tn) without any padding
    # or post-slice on the host side.
    d_vocab2 = 200
    W2 = jax.random.normal(k_w2, (d_model, d_vocab2), dtype=jnp.float32) / (
        d_vocab2**0.5
    )
    x2 = jax.random.normal(k_x2, (3, 5, d_model), dtype=jnp.float32)
    out2 = unembed(x2, prepare_unembed_weight(W2), tm=8, tn=128)
    out2 = jax.block_until_ready(out2)
    ref2 = jnp.matmul(
        x2.astype(jnp.bfloat16).astype(jnp.float32),
        W2.astype(jnp.bfloat16).astype(jnp.float32),
    )
    assert out2.shape == (3, 5, d_vocab2)
    assert jnp.allclose(out2, ref2, atol=1e-3, rtol=1e-3)

    print("KERNEL_OK")
</pallas_src>

<mosaic_0001>
module attributes {stable_mosaic.version = 11 : i64} {
  func.func @_unembed_kernel(%arg0: i32, %arg1: i32, %arg2: memref<16x32xbf16, #tpu.memory_space<vmem>>, %arg3: memref<32x128xbf16, #tpu.memory_space<vmem>>, %arg4: memref<16x128xf32, #tpu.memory_space<vmem>>) attributes {dimension_semantics = [#tpu.dimension_semantics<parallel>, #tpu.dimension_semantics<parallel>], iteration_bounds = array<i64: 1, 1>, scalar_prefetch = 0 : i64, scratch_operands = 0 : i64, tpu.core_type = #tpu.core_type<tc>, window_params = [{transform_indices = @transform_0, window_bounds = array<i64: 16, 32>}, {transform_indices = @transform_1, window_bounds = array<i64: 32, 128>}, {transform_indices = @transform_2, window_bounds = array<i64: 16, 128>}]} {
    %c0 = arith.constant 0 : index
    %c0_0 = arith.constant 0 : index
    %0 = vector.load %arg2[%c0, %c0_0] : memref<16x32xbf16, #tpu.memory_space<vmem>>, vector<16x32xbf16>
    %c0_1 = arith.constant 0 : index
    %c0_2 = arith.constant 0 : index
    %1 = vector.load %arg3[%c0_1, %c0_2] : memref<32x128xbf16, #tpu.memory_space<vmem>>, vector<32x128xbf16>
    %cst = arith.constant dense<0.000000e+00> : vector<16x128xf32>
    %2 = tpu.matmul %0, %1, %cst {dimension_numbers = #tpu.dot_dimension_numbers<[1], [0], [0], [1], [0, 0, 1, 1], [], []>} : vector<16x32xbf16>, vector<32x128xbf16>, vector<16x128xf32> -> vector<16x128xf32>
    %c0_3 = arith.constant 0 : index
    %c0_4 = arith.constant 0 : index
    %3 = vector.load %arg4[%c0_3, %c0_4] : memref<16x128xf32, #tpu.memory_space<vmem>>, vector<16x128xf32>
    tpu.vector_store %arg4[%c0_3, %c0_4], %2 {strides = array<i32>} : memref<16x128xf32, #tpu.memory_space<vmem>>, vector<16x128xf32>,
    return
  }
  func.func @transform_0(%arg0: i32, %arg1: i32) -> (i32, i32) {
    %c0_i32 = arith.constant 0 : i32
    %c0_i32_0 = arith.constant 0 : i32
    return %arg1, %c0_i32 : i32, i32
  }
  func.func @transform_1(%arg0: i32, %arg1: i32) -> (i32, i32) {
    %c0_i32 = arith.constant 0 : i32
    %c0_i32_0 = arith.constant 0 : i32
    return %c0_i32, %arg0 : i32, i32
  }
  func.func @transform_2(%arg0: i32, %arg1: i32) -> (i32, i32) {
    %c0_i32 = arith.constant 0 : i32
    return %arg1, %arg0 : i32, i32
  }
}

</mosaic_0001>

<llo_original>
// kernel: unembed.1
$region0: #{unembed.1}
  #allocation0 [shape = 'u32[]', space=smem, size = 0x4, offset = 0x4, fixed_abs, tag = 'smem constant byte address 0x4 - core index']
  #allocation1 [shape = 'u32[144,128]{1,0:T(1,128)}', space=vmem, size = 0x12000, scoped, tag = 'internal scratch']
  %s0 = inlined_call_operand.vmem [shape: bf16[16,32], index: 0, kind: input, shape index: {}]
  %s1 = inlined_call_operand.vmem [shape: bf16[32,128], index: 1, kind: input, shape index: {}]
  %s2 = inlined_call_operand.hbm [shape: f32[16,128], index: 2, kind: output, shape index: {}]
  %s3 = sld [smem:[#allocation0]]
  $region18: #{unembed.1} parent=0
    _
  %s5 = ssub.s32 1, %s3
  %s6 = scalar_select 0, %s5, %s3
  $region1: #{unembed.1} parent=0
    #allocation2 [shape = 'u8[8192]{0}', space=vmem, size = 0x2000, scoped, tag = 'output window, operand 0, single buffered']
    #allocation3 [shape = 's32[1]{0}', space=sflag, size = 0x4, scoped, tag = 'scoped memory for unembed.1']
    %7 = vsyncpa [#allocation3], 0
    // Predicated region
    $region2: #{unembed.1} parent=1 // pred_check
      _
    $region3: #{unembed.1} parent=1 // pred_check_branch
      %9 = sbr.rel (0) target = $region5
    $region4: #{unembed.1} parent=1 // pred_region
      _
    $region5: #{unembed.1} parent=1 // pred_fallthru
      _
    // Predicated region
    $region6: #{unembed.1} parent=1 // pred_check
      _
    $region7: #{unembed.1} parent=1 // pred_check_branch
      %11 = sbr.rel (0) target = $region9
    $region8: #{unembed.1} parent=1 // pred_region
      _
    $region9: #{unembed.1} parent=1 // pred_fallthru
      _
    %v13 = vld [vmem:[%s0] sm:$0xf]
    %v14 = vld [vmem:[%s0 + $0x4] sm:$0xf]
    %v15 = vld [vmem:[%s1] sm:$0xf]
    %v16 = vld [vmem:[%s1 + $0x4] sm:$0xf]
    %v17 = vld [vmem:[%s1 + $0x8] sm:$0xf]
    %v18 = vld [vmem:[%s1 + $0xc] sm:$0xf]
    %v21 = vunpack.c.l.b16 %v13
    %v22 = vunpack.c.l.b16 %v14
    %v23 = vpack.c.b16 %v22, %v21
    %v28 = vunpack.c.l.b16 %v15
    %v29 = vunpack.c.l.b16 %v16
    %v30 = vunpack.c.l.b16 %v17
    %v31 = vunpack.c.l.b16 %v18
    %v32 = vpack.c.b16 %v29, %v28
    %v33 = vpack.c.b16 %v31, %v30
    %vm36 = vcmask 261120
    %v38 = vsel %vm36, %v23, 0
    %40 = vmatprep.subr.bf16.mxu0 0
    %41 = vmatpush1.bf16.msra.mxu0 %v32
    %42 = vmatprep.subr.bf16.mxu0 0
    %43 = vmatpush1.bf16.msra.mxu0 %v33
    %44 = vmatprep.subr.bf16.mxu0 0
    %45 = vmatpush1.bf16.msra.mxu0 0
    %46 = vmatprep.subr.bf16.mxu0 0
    %47 = vmatpush1.bf16.msra.mxu0 0
    %48 = vmatprep.subr.bf16.mxu0 0
    %49 = vmatpush1.bf16.msra.mxu0 0
    %50 = vmatprep.subr.bf16.mxu0 0
    %51 = vmatpush1.bf16.msra.mxu0 0
    %52 = vmatprep.subr.bf16.mxu0 0
    %53 = vmatpush1.bf16.msra.mxu0 0
    %54 = vmatprep.subr.bf16.mxu0 0
    %55 = vmatpush1.bf16.msra.mxu0 0
    %56 = vmatprep.subr.bf16.mxu0 0
    %57 = vmatpush1.bf16.msra.mxu0 0
    %58 = vmatprep.subr.bf16.mxu0 0
    %59 = vmatpush1.bf16.msra.mxu0 0
    %60 = vmatprep.subr.bf16.mxu0 0
    %61 = vmatpush1.bf16.msra.mxu0 0
    %62 = vmatprep.subr.bf16.mxu0 0
    %63 = vmatpush1.bf16.msra.mxu0 0
    %64 = vmatprep.subr.bf16.mxu0 0
    %65 = vmatpush1.bf16.msra.mxu0 0
    %66 = vmatprep.subr.bf16.mxu0 0
    %67 = vmatpush1.bf16.msra.mxu0 0
    %68 = vmatprep.subr.bf16.mxu0 0
    %69 = vmatpush1.bf16.msra.mxu0 0
    %70 = vmatprep.subr.bf16.mxu0 0
    %71 = vmatpush1.bf16.msra.mxu0 0
    %72 = vmatprep.mubr.bf16.mxu0 0
    %73 = vmatmul.mubr.bf16.gmra.mrb[0].mxu0 %v38
    %v74 = vpop.f32.mrb[0].mxu0
    %v75 = vadd.f32 0.0, %v74
    %v76 = vpop.f32.mrb[0].mxu0
    %v77 = vpop.f32.mrb[0].mxu0
    %v78 = vadd.f32 0.0, %v77
    %v79 = vpop.f32.mrb[0].mxu0
    %80 = vdwg.mxu0
    %81 = vst [vmem:[#allocation2] sm:$0xff] %v75
    %82 = vst [vmem:[#allocation2 + $0x8] sm:$0xff] %v78
    // Predicated region
    $region10: #{unembed.1} parent=1 // pred_check
      _
    $region11: #{unembed.1} parent=1 // pred_check_branch
      %84 = sbr.rel (0) target = $region13
    $region12: #{unembed.1} parent=1 // pred_region
      %s86 = ssub.s32 256, 256
      %87 = vsyncadd [#allocation3], %s86
      %s88 = sshll.u32 [#allocation2], 4
      %s89 = int_to_ptr.vmem [resolvable:$true] %s88
      %94 = dma.vmem_to_hbm [thread:$0]  %s89, 256, %s2, [#allocation3], 128, 128, 8
    $region13: #{unembed.1} parent=1 // pred_fallthru
      _
    // Predicated region
    $region14: #{unembed.1} parent=1 // pred_check
      _
    $region15: #{unembed.1} parent=1 // pred_check_branch
      %96 = sbr.rel (0) target = $region17
    $region16: #{unembed.1} parent=1 // pred_region
      %97 = dma.done [#allocation3], 256
    $region17: #{unembed.1} parent=1 // pred_fallthru
      _
    %98 = vsyncpa [#allocation3], 1

</llo_original>
